<compile_context>
chip_gen: v7x
topology: tpu7x:2x2x1
jax: 0.10.0
libtpu: 0.0.40
codegen_flags: <defaults>
</compile_context>

<pallas_src>
import functools
from typing import Dict, List, Tuple

import numpy as np
import jax
import jax.numpy as jnp
from jax.experimental import pallas as pl
from jax.experimental.pallas import tpu as pltpu


# --------------------------------------------------------------------------
# Configuration (small, consistent with the module's __init__ / forward)
# --------------------------------------------------------------------------
BATCH_SIZE = 2
INPUT_SIZE = 16
HIDDEN_SIZES: List[int] = [32, 32]
USE_OUTER_NET = False  # module default

# Downstream network whose parameters the hypernetwork predicts:
# a tiny MLP: Linear(8 -> 4), Linear(4 -> 2)  (PyTorch param layout: (out, in))
TARGET_NAMED_PARAM_SIZES: Dict[str, Tuple[int, ...]] = {
    "fc1.weight": (4, 8),
    "fc1.bias": (4,),
    "fc2.weight": (2, 4),
    "fc2.bias": (2,),
}

LANE = 128     # vreg lane width (last dim alignment)
SUBLANE = 8    # vreg sublane count (second-to-last dim alignment, f32)

TOTAL_PRED = int(sum(int(np.prod(s)) for s in TARGET_NAMED_PARAM_SIZES.values()))


def _round_up(x: int, m: int) -> int:
    return ((x + m - 1) // m) * m


N_HEAD_PAD = _round_up(TOTAL_PRED, LANE)   # only the head output is lane-padded


# --------------------------------------------------------------------------
# Pallas kernel: fused MLP over one M-row block, params resident in VMEM
# --------------------------------------------------------------------------
def _fused_hyper_kernel(x_ref, p_ref, o_ref, *, layer_layout, bias_band_row):
    """x_ref: (TM, K0) f32, p_ref: (P_ROWS, 128) packed params, o_ref: (TM, 128).

    layer_layout: static tuple of (w_row, K, N_view) per layer; the last layer
    is the concatenated weight-predictor head (no ReLU, N_view = 128 padded).
    Biases live un-broadcast in one 8-row band starting at bias_band_row
    (row i of the band = bias of layer i, real data in lanes [0, N)).
    """
    h = x_ref[...]                                                  # (TM, K0)
    bias_band = p_ref[bias_band_row:bias_band_row + SUBLANE, :]     # (8, 128)
    num_layers = len(layer_layout)
    for i, (w_row, k, n) in enumerate(layer_layout):
        w = p_ref[w_row:w_row + k, 0:n]            # static view -> (k, n) tile
        b = bias_band[i:i + 1, 0:n]                # (1, n), broadcasts over M
        h = jnp.dot(h, w, preferred_element_type=jnp.float32) + b
        if i < num_layers - 1:                     # ReLU on all but the head
            h = jnp.maximum(h, 0.0)
    o_ref[...] = h.astype(o_ref.dtype)


def fused_hypernet_pallas(x_rows: jax.Array, param_slab: jax.Array, *,
                          layer_layout, bias_band_row: int, tm: int) -> jax.Array:
    """Runs T stacked hypernetwork invocations (one per row of x_rows).

    x_rows:     (T, K0) f32, T a multiple of tm (tm a multiple of 8).
    param_slab: (P_ROWS, 128) f32 packed weights/biases (one DMA, resident).
    Returns (T, N_HEAD_PAD) lane-dense head output (useful lanes [0, TOTAL_PRED)).
    """
    t, k0 = x_rows.shape
    assert t % tm == 0 and tm % SUBLANE == 0
    p_rows = param_slab.shape[0]
    grid = (t // tm,)

    kernel = functools.partial(_fused_hyper_kernel,
                               layer_layout=layer_layout,
                               bias_band_row=bias_band_row)
    return pl.pallas_call(
        kernel,
        out_shape=jax.ShapeDtypeStruct((t, N_HEAD_PAD), jnp.float32),
        grid_spec=pltpu.PrefetchScalarGridSpec(
            num_scalar_prefetch=0,
            grid=grid,
            in_specs=[
                # streamed: one M-row block of stacked invocations per step
                pl.BlockSpec((tm, k0), lambda i: (i, 0)),
                # resident: constant block index -> fetched once for the grid
                pl.BlockSpec((p_rows, LANE), lambda i: (0, 0)),
            ],
            out_specs=pl.BlockSpec((tm, N_HEAD_PAD), lambda i: (i, 0)),
        ),
        compiler_params=pltpu.CompilerParams(
            dimension_semantics=("parallel",)),   # v7x: both TCs share the grid
    )(x_rows, param_slab)


# --------------------------------------------------------------------------
# Parameter construction (deterministic, in-script)
# --------------------------------------------------------------------------
def init_hypernet_params(key: jax.Array):
    """Builds all hypernetwork parameters (logical, weights stored (in, out))."""
    params = {}

    layer_in_sizes = [INPUT_SIZE * BATCH_SIZE] + HIDDEN_SIZES[:-1]
    inner = []
    for fan_in, fan_out in zip(layer_in_sizes, HIDDEN_SIZES):
        key, kw, kb = jax.random.split(key, 3)
        bound = 1.0 / np.sqrt(fan_in)
        w = jax.random.uniform(kw, (fan_in, fan_out), jnp.float32, -bound, bound)
        b = jax.random.uniform(kb, (fan_out,), jnp.float32, -bound, bound)
        inner.append((w, b))
    params["inner"] = inner

    if USE_OUTER_NET:
        outer = []
        h = HIDDEN_SIZES[-1]
        for _ in range(3):
            key, kw, kb = jax.random.split(key, 3)
            bound = 1.0 / np.sqrt(h)
            w = jax.random.uniform(kw, (h, h), jnp.float32, -bound, bound)
            b = jax.random.uniform(kb, (h,), jnp.float32, -bound, bound)
            outer.append((w, b))
        params["outer"] = outer

    # Weight predictors: one Linear(hidden[-1] -> prod(param_size)) per target
    # parameter, fused into one concatenated (hidden, sum(prods)) matmul.
    h = HIDDEN_SIZES[-1]
    pred_ws, pred_bs = [], []
    for shape in TARGET_NAMED_PARAM_SIZES.values():
        n = int(np.prod(shape))
        key, kw, kb = jax.random.split(key, 3)
        bound = 1.0 / np.sqrt(h)
        pred_ws.append(jax.random.uniform(kw, (h, n), jnp.float32, -bound, bound))
        pred_bs.append(jax.random.uniform(kb, (n,), jnp.float32, -bound, bound))
    params["pred_w"] = jnp.concatenate(pred_ws, axis=1)
    params["pred_b"] = jnp.concatenate(pred_bs, axis=0)
    return params


def build_param_slab(params):
    """One-time packing of every weight/bias into a single (rows, 128) slab.

    Per-layer weights sit at sublane-aligned row offsets with their logical
    (K, N) extents (no 128-wide K/N padding except the head's output lanes,
    which stay zero-padded to 128 for a lane-dense output store).  Biases are
    stored un-broadcast, one per row of a trailing 8-row band.  Zero padding
    contributes nothing to any dot product, so the chained matmuls are exact.
    """
    layers = list(params["inner"])
    if USE_OUTER_NET:
        layers += list(params["outer"])
    layers.append((params["pred_w"], params["pred_b"]))
    num_layers = len(layers)
    # TODO(synk): >8 layers would need multiple bias bands; this config has 3.
    assert num_layers <= SUBLANE

    layout = []
    row = 0
    for i, (w, _b) in enumerate(layers):
        k, n = w.shape
        n_view = N_HEAD_PAD if i == num_layers - 1 else n
        assert n_view <= LANE, "hidden width > 128 would need lane splitting"
        layout.append((row, k, n_view))
        row += _round_up(k, SUBLANE)
    bias_band_row = row
    total_rows = _round_up(bias_band_row + SUBLANE, SUBLANE)

    slab = np.zeros((total_rows, LANE), np.float32)
    for i, ((w_row, k, _n_view), (w, b)) in enumerate(zip(layout, layers)):
        n = w.shape[1]
        slab[w_row:w_row + k, :n] = np.asarray(w, dtype=np.float32)
        slab[bias_band_row + i, :n] = np.asarray(b, dtype=np.float32)
    return jnp.asarray(slab), tuple(layout), bias_band_row


# --------------------------------------------------------------------------
# Forward passes (Pallas) and pure-JAX reference
# --------------------------------------------------------------------------
def hypernet_forward_pallas(x, param_slab, layer_layout, bias_band_row):
    """Module-semantics forward: one invocation -> dict of predicted params."""
    k0 = INPUT_SIZE * BATCH_SIZE
    row = x.reshape(-1, k0).astype(jnp.float32)                     # (1, K0)
    m = row.shape[0]
    rows = jnp.zeros((SUBLANE, k0), jnp.float32).at[:m].set(row)    # pad M to 8
    out_slab = fused_hypernet_pallas(rows, param_slab,
                                     layer_layout=layer_layout,
                                     bias_band_row=bias_band_row,
                                     tm=SUBLANE)                    # (8, 128)
    flat = out_slab[0, :TOTAL_PRED]        # slice the useful lanes exactly once
    out, off = {}, 0
    for name, shape in TARGET_NAMED_PARAM_SIZES.items():
        n = int(np.prod(shape))
        out[name] = flat[off:off + n].reshape(shape)
        off += n
    return out


def hypernet_forward_pallas_batched(x_stack, param_slab, layer_layout,
                                    bias_band_row, tm=16):
    """T independent hypernetwork invocations stacked onto the MXU M dimension.

    x_stack: (T, batch_size, input_size).  One pallas_call, one weight DMA,
    grid over T//tm row blocks.  Returns the (T, TOTAL_PRED) flat predictions.
    """
    t = x_stack.shape[0]
    k0 = INPUT_SIZE * BATCH_SIZE
    rows = x_stack.reshape(t, k0).astype(jnp.float32)
    tp = _round_up(t, tm)
    if tp != t:
        rows = jnp.zeros((tp, k0), jnp.float32).at[:t].set(rows)
    out_slab = fused_hypernet_pallas(rows, param_slab,
                                     layer_layout=layer_layout,
                                     bias_band_row=bias_band_row,
                                     tm=tm)                         # (Tp, 128)
    return out_slab[:t, :TOTAL_PRED]


def _reference_rows(rows, params):
    h = rows
    for w, b in params["inner"]:
        h = jnp.maximum(h @ w + b, 0.0)
    if USE_OUTER_NET:
        for w, b in params["outer"]:
            h = jnp.maximum(h @ w + b, 0.0)
    return h @ params["pred_w"] + params["pred_b"]


def hypernet_forward_reference(x, params) -> Dict[str, jax.Array]:
    flat = _reference_rows(x.reshape(-1, INPUT_SIZE * BATCH_SIZE), params)[0]
    out, off = {}, 0
    for name, shape in TARGET_NAMED_PARAM_SIZES.items():
        n = int(np.prod(shape))
        out[name] = flat[off:off + n].reshape(shape)
        off += n
    return out


# --------------------------------------------------------------------------
if __name__ == "__main__":
    key = jax.random.PRNGKey(0)
    key, xkey, bkey = jax.random.split(key, 3)

    # Input batch for the hypernetwork: (batch_size, input_size)
    x = jax.random.normal(xkey, (BATCH_SIZE, INPUT_SIZE), dtype=jnp.float32)

    params = init_hypernet_params(key)

    # One-time packing of every weight/bias into one padded VMEM slab.
    param_slab, layer_layout, bias_band_row = build_param_slab(params)
    param_slab = jax.block_until_ready(param_slab)

    ok = True

    # ---- Module-semantics forward (single invocation) ---------------------
    fwd = jax.jit(lambda xx, pp: hypernet_forward_pallas(
        xx, pp, layer_layout, bias_band_row))
    out = fwd(x, param_slab)
    out = jax.tree_util.tree_map(jax.block_until_ready, out)
    ref = hypernet_forward_reference(x, params)
    for name, shape in TARGET_NAMED_PARAM_SIZES.items():
        if tuple(out[name].shape) != tuple(shape):
            ok = False
        if not np.allclose(np.asarray(out[name]), np.asarray(ref[name]),
                           rtol=1e-5, atol=1e-5):
            ok = False

    # ---- M-batched forward: 32 invocations, one call, one weight DMA ------
    T = 32
    x_stack = jax.random.normal(bkey, (T, BATCH_SIZE, INPUT_SIZE),
                                dtype=jnp.float32)
    fwd_b = jax.jit(lambda xx, pp: hypernet_forward_pallas_batched(
        xx, pp, layer_layout, bias_band_row, tm=16))
    flat_b = jax.block_until_ready(fwd_b(x_stack, param_slab))       # (T, 46)
    flat_ref = _reference_rows(x_stack.reshape(T, -1), params)
    if not np.allclose(np.asarray(flat_b), np.asarray(flat_ref),
                       rtol=1e-5, atol=1e-5):
        ok = False

    print("KERNEL_OK" if ok else "KERNEL_MISMATCH")
</pallas_src>

<mosaic_0001>
module attributes {stable_mosaic.version = 11 : i64} {
  func.func @_fused_hyper_kernel(%arg0: i32, %arg1: memref<8x32xf32, #tpu.memory_space<vmem>>, %arg2: memref<104x128xf32, #tpu.memory_space<vmem>>, %arg3: memref<8x128xf32, #tpu.memory_space<vmem>>) attributes {dimension_semantics = [#tpu.dimension_semantics<parallel>], iteration_bounds = array<i64: 1>, scalar_prefetch = 0 : i64, scratch_operands = 0 : i64, tpu.core_type = #tpu.core_type<tc>, window_params = [{transform_indices = @transform_0, window_bounds = array<i64: 8, 32>}, {pipeline_mode = #tpu.pipeline_mode<synchronous>, transform_indices = @transform_1, window_bounds = array<i64: 104, 128>}, {transform_indices = @transform_2, window_bounds = array<i64: 8, 128>}]} {
    %c0 = arith.constant 0 : index
    %c0_0 = arith.constant 0 : index
    %0 = vector.load %arg1[%c0, %c0_0] : memref<8x32xf32, #tpu.memory_space<vmem>>, vector<8x32xf32>
    %c96 = arith.constant 96 : index
    %c0_1 = arith.constant 0 : index
    %1 = vector.load %arg2[%c96, %c0_1] : memref<104x128xf32, #tpu.memory_space<vmem>>, vector<8x128xf32>
    %c0_2 = arith.constant 0 : index
    %c0_3 = arith.constant 0 : index
    %2 = vector.load %arg2[%c0_2, %c0_3] : memref<104x128xf32, #tpu.memory_space<vmem>>, vector<32x32xf32>
    %3 = vector.extract_strided_slice %1 {offsets = [0, 0], sizes = [1, 32], strides = [1, 1]} : vector<8x128xf32> to vector<1x32xf32>
    %cst = arith.constant dense<0.000000e+00> : vector<8x32xf32>
    %4 = tpu.matmul %0, %2, %cst {dimension_numbers = #tpu.dot_dimension_numbers<[1], [0], [0], [1], [0, 0, 1, 1], [], []>} : vector<8x32xf32>, vector<32x32xf32>, vector<8x32xf32> -> vector<8x32xf32>
    %5 = vector.broadcast %3 : vector<1x32xf32> to vector<8x32xf32>
    %6 = arith.addf %4, %5 : vector<8x32xf32>
    %cst_4 = arith.constant 0.000000e+00 : f32
    %7 = vector.broadcast %cst_4 : f32 to vector<8x32xf32>
    %8 = arith.maximumf %6, %7 : vector<8x32xf32>
    %c32 = arith.constant 32 : index
    %c0_5 = arith.constant 0 : index
    %9 = vector.load %arg2[%c32, %c0_5] : memref<104x128xf32, #tpu.memory_space<vmem>>, vector<32x32xf32>
    %10 = vector.extract_strided_slice %1 {offsets = [1, 0], sizes = [1, 32], strides = [1, 1]} : vector<8x128xf32> to vector<1x32xf32>
    %cst_6 = arith.constant dense<0.000000e+00> : vector<8x32xf32>
    %11 = tpu.matmul %8, %9, %cst_6 {dimension_numbers = #tpu.dot_dimension_numbers<[1], [0], [0], [1], [0, 0, 1, 1], [], []>} : vector<8x32xf32>, vector<32x32xf32>, vector<8x32xf32> -> vector<8x32xf32>
    %12 = vector.broadcast %10 : vector<1x32xf32> to vector<8x32xf32>
    %13 = arith.addf %11, %12 : vector<8x32xf32>
    %cst_7 = arith.constant 0.000000e+00 : f32
    %14 = vector.broadcast %cst_7 : f32 to vector<8x32xf32>
    %15 = arith.maximumf %13, %14 : vector<8x32xf32>
    %c64 = arith.constant 64 : index
    %c0_8 = arith.constant 0 : index
    %16 = vector.load %arg2[%c64, %c0_8] : memref<104x128xf32, #tpu.memory_space<vmem>>, vector<32x128xf32>
    %17 = vector.extract_strided_slice %1 {offsets = [2, 0], sizes = [1, 128], strides = [1, 1]} : vector<8x128xf32> to vector<1x128xf32>
    %cst_9 = arith.constant dense<0.000000e+00> : vector<8x128xf32>
    %18 = tpu.matmul %15, %16, %cst_9 {dimension_numbers = #tpu.dot_dimension_numbers<[1], [0], [0], [1], [0, 0, 1, 1], [], []>} : vector<8x32xf32>, vector<32x128xf32>, vector<8x128xf32> -> vector<8x128xf32>
    %19 = vector.broadcast %17 : vector<1x128xf32> to vector<8x128xf32>
    %20 = arith.addf %18, %19 : vector<8x128xf32>
    %c0_10 = arith.constant 0 : index
    %c0_11 = arith.constant 0 : index
    %21 = vector.load %arg3[%c0_10, %c0_11] : memref<8x128xf32, #tpu.memory_space<vmem>>, vector<8x128xf32>
    tpu.vector_store %arg3[%c0_10, %c0_11], %20 {strides = array<i32>} : memref<8x128xf32, #tpu.memory_space<vmem>>, vector<8x128xf32>,
    return
  }
  func.func @transform_0(%arg0: i32) -> (i32, i32) {
    %c0_i32 = arith.constant 0 : i32
    %c0_i32_0 = arith.constant 0 : i32
    return %arg0, %c0_i32 : i32, i32
  }
  func.func @transform_1(%arg0: i32) -> (i32, i32) {
    %c0_i32 = arith.constant 0 : i32
    %c0_i32_0 = arith.constant 0 : i32
    %c0_i32_1 = arith.constant 0 : i32
    return %c0_i32, %c0_i32_0 : i32, i32
  }
  func.func @transform_2(%arg0: i32) -> (i32, i32) {
    %c0_i32 = arith.constant 0 : i32
    %c0_i32_0 = arith.constant 0 : i32
    return %arg0, %c0_i32 : i32, i32
  }
}

</mosaic_0001>

<llo_original>
// kernel: _lambda_.1
$region0: #{_lambda_.1}
  #allocation0 [shape = 'u32[]', space=smem, size = 0x4, offset = 0x4, fixed_abs, tag = 'smem constant byte address 0x4 - core index']
  #allocation1 [shape = 'u32[144,128]{1,0:T(1,128)}', space=vmem, size = 0x12000, scoped, tag = 'internal scratch']
  %s0 = inlined_call_operand.vmem [shape: f32[8,32], index: 0, kind: input, shape index: {}]
  %s1 = inlined_call_operand.hbm [shape: f32[104,128], index: 1, kind: input, shape index: {}]
  %s2 = inlined_call_operand.vmem [shape: f32[8,128], index: 2, kind: output, shape index: {}]
  %s3 = sld [smem:[#allocation0]]
  $region22: #{_lambda_.1} parent=0
    _
  %s5 = ssub.s32 1, %s3
  %s6 = scalar_select 0, %s5, %s3
  $region1: #{_lambda_.1} parent=0
    #allocation2 [shape = 'u8[53248]{0}', space=vmem, size = 0xd000, scoped, tag = 'input window, operand 1, single buffered']
    #allocation3 [shape = 's32[1]{0}', space=sflag, size = 0x4, scoped, tag = 'scoped memory for _lambda_.1']
    %7 = vsyncpa [#allocation3], 0
    // Predicated region
    $region2: #{_lambda_.1} parent=1 // pred_check
      _
    $region3: #{_lambda_.1} parent=1 // pred_check_branch
      %9 = sbr.rel (0) target = $region5
    $region4: #{_lambda_.1} parent=1 // pred_region
      _
    $region5: #{_lambda_.1} parent=1 // pred_fallthru
      _
    // Predicated region
    $region6: #{_lambda_.1} parent=1 // pred_check
      _
    $region7: #{_lambda_.1} parent=1 // pred_check_branch
      %11 = sbr.rel (0) target = $region9
    $region8: #{_lambda_.1} parent=1 // pred_region
      %s13 = ssub.s32 1664, 1664
      %14 = vsyncadd [#allocation3], %s13
      %s15 = sshll.u32 [#allocation2], 4
      %s16 = int_to_ptr.vmem [resolvable:$true] %s15
      %21 = dma.hbm_to_vmem [thread:$0]  %s1, 1664, %s16, [#allocation3], 128, 128, 8
    $region9: #{_lambda_.1} parent=1 // pred_fallthru
      _
    // Predicated region
    $region10: #{_lambda_.1} parent=1 // pred_check
      _
    $region11: #{_lambda_.1} parent=1 // pred_check_branch
      %23 = sbr.rel (0) target = $region13
    $region12: #{_lambda_.1} parent=1 // pred_region
      %24 = dma.done [#allocation3], 1664
    $region13: #{_lambda_.1} parent=1 // pred_fallthru
      _
    %v25 = vld [vmem:[%s0] sm:$0xff]
    %v26 = vld [vmem:[#allocation2 + $0x60] sm:$0xff]
    %v27 = vld [vmem:[#allocation2] sm:$0xff]
    %v28 = vld [vmem:[#allocation2 + $0x8] sm:$0xff]
    %v29 = vld [vmem:[#allocation2 + $0x10] sm:$0xff]
    %v30 = vld [vmem:[#allocation2 + $0x18] sm:$0xff]
    %v31 = vlaneseq
    %v32 = vshrl.u32 %v31, 7
    %v33 = vsub.s32 0, %v32
    %v34 = vrot.slane %v26, %v33
    %vm35 = vcmask 261120
    %v37 = vsel %vm35, %v25, 0
    %39 = vmatprep.subr.mxu0 0.0
    %40 = vmatpush1.msra.mxu0 %v27
    %41 = vmatprep.subr.mxu0 0.0
    %42 = vmatpush1.msra.mxu0 %v28
    %43 = vmatprep.subr.mxu0 0.0
    %44 = vmatpush1.msra.mxu0 %v29
    %45 = vmatprep.subr.mxu0 0.0
    %46 = vmatpush1.msra.mxu0 %v30
    %47 = vmatprep.subr.mxu0 0.0
    %48 = vmatpush1.msra.mxu0 0.0
    %49 = vmatprep.subr.mxu0 0.0
    %50 = vmatpush1.msra.mxu0 0.0
    %51 = vmatprep.subr.mxu0 0.0
    %52 = vmatpush1.msra.mxu0 0.0
    %53 = vmatprep.subr.mxu0 0.0
    %54 = vmatpush1.msra.mxu0 0.0
    %55 = vmatprep.subr.mxu0 0.0
    %56 = vmatpush1.msra.mxu0 0.0
    %57 = vmatprep.subr.mxu0 0.0
    %58 = vmatpush1.msra.mxu0 0.0
    %59 = vmatprep.subr.mxu0 0.0
    %60 = vmatpush1.msra.mxu0 0.0
    %61 = vmatprep.subr.mxu0 0.0
    %62 = vmatpush1.msra.mxu0 0.0
    %63 = vmatprep.subr.mxu0 0.0
    %64 = vmatpush1.msra.mxu0 0.0
    %65 = vmatprep.subr.mxu0 0.0
    %66 = vmatpush1.msra.mxu0 0.0
    %67 = vmatprep.subr.mxu0 0.0
    %68 = vmatpush1.msra.mxu0 0.0
    %69 = vmatprep.subr.mxu0 0.0
    %70 = vmatpush1.msra.mxu0 0.0
    %71 = vmatprep.subr.mxu0 0.0
    %72 = vmatpush1.msra.mxu0 0.0
    %73 = vmatprep.subr.mxu0 0.0
    %74 = vmatpush1.msra.mxu0 0.0
    %75 = vmatprep.subr.mxu0 0.0
    %76 = vmatpush1.msra.mxu0 0.0
    %77 = vmatprep.subr.mxu0 0.0
    %78 = vmatpush1.msra.mxu0 0.0
    %79 = vmatprep.subr.mxu0 0.0
    %80 = vmatpush1.msra.mxu0 0.0
    %81 = vmatprep.subr.mxu0 0.0
    %82 = vmatpush1.msra.mxu0 0.0
    %83 = vmatprep.subr.mxu0 0.0
    %84 = vmatpush1.msra.mxu0 0.0
    %85 = vmatprep.subr.mxu0 0.0
    %86 = vmatpush1.msra.mxu0 0.0
    %87 = vmatprep.subr.mxu0 0.0
    %88 = vmatpush1.msra.mxu0 0.0
    %89 = vmatprep.subr.mxu0 0.0
    %90 = vmatpush1.msra.mxu0 0.0
    %91 = vmatprep.subr.mxu0 0.0
    %92 = vmatpush1.msra.mxu0 0.0
    %93 = vmatprep.subr.mxu0 0.0
    %94 = vmatpush1.msra.mxu0 0.0
    %95 = vmatprep.subr.mxu0 0.0
    %96 = vmatpush1.msra.mxu0 0.0
    %97 = vmatprep.subr.mxu0 0.0
    %98 = vmatpush1.msra.mxu0 0.0
    %99 = vmatprep.subr.mxu0 0.0
    %100 = vmatpush1.msra.mxu0 0.0
    %101 = vmatprep.subr.mxu0 0.0
    %102 = vmatpush1.msra.mxu0 0.0
    %103 = vmatprep.mubr.f32.mxu0 0.0
    %104 = vmatmul.mubr.f32.gmra.mrb[0].mxu0 %v37
    %v105 = vpop.f32.mrb[0].mxu0
    %v106 = vadd.f32 %v34, %v105
    %v107 = vpop.f32.mrb[0].mxu0
    %108 = vdwg.mxu0
    %v109 = vmax.f32 %v106, 0.0
    %v110 = vld [vmem:[#allocation2 + $0x20] sm:$0xff]
    %v111 = vld [vmem:[#allocation2 + $0x28] sm:$0xff]
    %v112 = vld [vmem:[#allocation2 + $0x30] sm:$0xff]
    %v113 = vld [vmem:[#allocation2 + $0x38] sm:$0xff]
    %v114 = vlaneseq
    %v115 = vshrl.u32 %v114, 7
    %v116 = vsub.s32 1, %v115
    %v117 = vrot.slane %v26, %v116
    %v119 = vsel %vm35, %v109, 0
    %121 = vmatprep.subr.mxu0 0.0
    %122 = vmatpush1.msra.mxu0 %v110
    %123 = vmatprep.subr.mxu0 0.0
    %124 = vmatpush1.msra.mxu0 %v111
    %125 = vmatprep.subr.mxu0 0.0
    %126 = vmatpush1.msra.mxu0 %v112
    %127 = vmatprep.subr.mxu0 0.0
    %128 = vmatpush1.msra.mxu0 %v113
    %129 = vmatprep.subr.mxu0 0.0
    %130 = vmatpush1.msra.mxu0 0.0
    %131 = vmatprep.subr.mxu0 0.0
    %132 = vmatpush1.msra.mxu0 0.0
    %133 = vmatprep.subr.mxu0 0.0
    %134 = vmatpush1.msra.mxu0 0.0
    %135 = vmatprep.subr.mxu0 0.0
    %136 = vmatpush1.msra.mxu0 0.0
    %137 = vmatprep.subr.mxu0 0.0
    %138 = vmatpush1.msra.mxu0 0.0
    %139 = vmatprep.subr.mxu0 0.0
    %140 = vmatpush1.msra.mxu0 0.0
    %141 = vmatprep.subr.mxu0 0.0
    %142 = vmatpush1.msra.mxu0 0.0
    %143 = vmatprep.subr.mxu0 0.0
    %144 = vmatpush1.msra.mxu0 0.0
    %145 = vmatprep.subr.mxu0 0.0
    %146 = vmatpush1.msra.mxu0 0.0
    %147 = vmatprep.subr.mxu0 0.0
    %148 = vmatpush1.msra.mxu0 0.0
    %149 = vmatprep.subr.mxu0 0.0
    %150 = vmatpush1.msra.mxu0 0.0
    %151 = vmatprep.subr.mxu0 0.0
    %152 = vmatpush1.msra.mxu0 0.0
    %153 = vmatprep.subr.mxu0 0.0
    %154 = vmatpush1.msra.mxu0 0.0
    %155 = vmatprep.subr.mxu0 0.0
    %156 = vmatpush1.msra.mxu0 0.0
    %157 = vmatprep.subr.mxu0 0.0
    %158 = vmatpush1.msra.mxu0 0.0
    %159 = vmatprep.subr.mxu0 0.0
    %160 = vmatpush1.msra.mxu0 0.0
    %161 = vmatprep.subr.mxu0 0.0
    %162 = vmatpush1.msra.mxu0 0.0
    %163 = vmatprep.subr.mxu0 0.0
    %164 = vmatpush1.msra.mxu0 0.0
    %165 = vmatprep.subr.mxu0 0.0
    %166 = vmatpush1.msra.mxu0 0.0
    %167 = vmatprep.subr.mxu0 0.0
    %168 = vmatpush1.msra.mxu0 0.0
    %169 = vmatprep.subr.mxu0 0.0
    %170 = vmatpush1.msra.mxu0 0.0
    %171 = vmatprep.subr.mxu0 0.0
    %172 = vmatpush1.msra.mxu0 0.0
    %173 = vmatprep.subr.mxu0 0.0
    %174 = vmatpush1.msra.mxu0 0.0
    %175 = vmatprep.subr.mxu0 0.0
    %176 = vmatpush1.msra.mxu0 0.0
    %177 = vmatprep.subr.mxu0 0.0
    %178 = vmatpush1.msra.mxu0 0.0
    %179 = vmatprep.subr.mxu0 0.0
    %180 = vmatpush1.msra.mxu0 0.0
    %181 = vmatprep.subr.mxu0 0.0
    %182 = vmatpush1.msra.mxu0 0.0
    %183 = vmatprep.subr.mxu0 0.0
    %184 = vmatpush1.msra.mxu0 0.0
    %185 = vmatprep.mubr.f32.mxu0 0.0
    %186 = vmatmul.mubr.f32.gmra.mrb[0].mxu0 %v119
    %v187 = vpop.f32.mrb[0].mxu0
    %v188 = vadd.f32 %v117, %v187
    %v189 = vpop.f32.mrb[0].mxu0
    %190 = vdwg.mxu0
    %v191 = vmax.f32 %v188, 0.0
    %v192 = vld [vmem:[#allocation2 + $0x40] sm:$0xff]
    %v193 = vld [vmem:[#allocation2 + $0x48] sm:$0xff]
    %v194 = vld [vmem:[#allocation2 + $0x50] sm:$0xff]
    %v195 = vld [vmem:[#allocation2 + $0x58] sm:$0xff]
    %v196 = vlaneseq
    %v197 = vshrl.u32 %v196, 7
    %v198 = vsub.s32 2, %v197
    %v199 = vrot.slane %v26, %v198
    %v201 = vsel %vm35, %v191, 0
    %203 = vmatprep.subr.mxu0 0.0
    %204 = vmatpush1.msra.mxu0 %v192
    %205 = vmatprep.subr.mxu0 0.0
    %206 = vmatpush1.msra.mxu0 %v193
    %207 = vmatprep.subr.mxu0 0.0
    %208 = vmatpush1.msra.mxu0 %v194
    %209 = vmatprep.subr.mxu0 0.0
    %210 = vmatpush1.msra.mxu0 %v195
    %211 = vmatprep.subr.mxu0 0.0
    %212 = vmatpush1.msra.mxu0 0.0
    %213 = vmatprep.subr.mxu0 0.0
    %214 = vmatpush1.msra.mxu0 0.0
    %215 = vmatprep.subr.mxu0 0.0
    %216 = vmatpush1.msra.mxu0 0.0
    %217 = vmatprep.subr.mxu0 0.0
    %218 = vmatpush1.msra.mxu0 0.0
    %219 = vmatprep.subr.mxu0 0.0
    %220 = vmatpush1.msra.mxu0 0.0
    %221 = vmatprep.subr.mxu0 0.0
    %222 = vmatpush1.msra.mxu0 0.0
    %223 = vmatprep.subr.mxu0 0.0
    %224 = vmatpush1.msra.mxu0 0.0
    %225 = vmatprep.subr.mxu0 0.0
    %226 = vmatpush1.msra.mxu0 0.0
    %227 = vmatprep.subr.mxu0 0.0
    %228 = vmatpush1.msra.mxu0 0.0
    %229 = vmatprep.subr.mxu0 0.0
    %230 = vmatpush1.msra.mxu0 0.0
    %231 = vmatprep.subr.mxu0 0.0
    %232 = vmatpush1.msra.mxu0 0.0
    %233 = vmatprep.subr.mxu0 0.0
    %234 = vmatpush1.msra.mxu0 0.0
    %235 = vmatprep.subr.mxu0 0.0
    %236 = vmatpush1.msra.mxu0 0.0
    %237 = vmatprep.subr.mxu0 0.0
    %238 = vmatpush1.msra.mxu0 0.0
    %239 = vmatprep.subr.mxu0 0.0
    %240 = vmatpush1.msra.mxu0 0.0
    %241 = vmatprep.subr.mxu0 0.0
    %242 = vmatpush1.msra.mxu0 0.0
    %243 = vmatprep.subr.mxu0 0.0
    %244 = vmatpush1.msra.mxu0 0.0
    %245 = vmatprep.subr.mxu0 0.0
    %246 = vmatpush1.msra.mxu0 0.0
    %247 = vmatprep.subr.mxu0 0.0
    %248 = vmatpush1.msra.mxu0 0.0
    %249 = vmatprep.subr.mxu0 0.0
    %250 = vmatpush1.msra.mxu0 0.0
    %251 = vmatprep.subr.mxu0 0.0
    %252 = vmatpush1.msra.mxu0 0.0
    %253 = vmatprep.subr.mxu0 0.0
    %254 = vmatpush1.msra.mxu0 0.0
    %255 = vmatprep.subr.mxu0 0.0
    %256 = vmatpush1.msra.mxu0 0.0
    %257 = vmatprep.subr.mxu0 0.0
    %258 = vmatpush1.msra.mxu0 0.0
    %259 = vmatprep.subr.mxu0 0.0
    %260 = vmatpush1.msra.mxu0 0.0
    %261 = vmatprep.subr.mxu0 0.0
    %262 = vmatpush1.msra.mxu0 0.0
    %263 = vmatprep.subr.mxu0 0.0
    %264 = vmatpush1.msra.mxu0 0.0
    %265 = vmatprep.subr.mxu0 0.0
    %266 = vmatpush1.msra.mxu0 0.0
    %267 = vmatprep.mubr.f32.mxu0 0.0
    %268 = vmatmul.mubr.f32.gmra.mrb[0].mxu0 %v201
    %v269 = vpop.f32.mrb[0].mxu0
    %v270 = vadd.f32 %v199, %v269
    %v271 = vpop.f32.mrb[0].mxu0
    %272 = vdwg.mxu0
    %273 = vst [vmem:[%s2] sm:$0xff] %v270
    // Predicated region
    $region14: #{_lambda_.1} parent=1 // pred_check
      _
    $region15: #{_lambda_.1} parent=1 // pred_check_branch
      %275 = sbr.rel (0) target = $region17
    $region16: #{_lambda_.1} parent=1 // pred_region
      _
    $region17: #{_lambda_.1} parent=1 // pred_fallthru
      _
    // Predicated region
    $region18: #{_lambda_.1} parent=1 // pred_check
      _
    $region19: #{_lambda_.1} parent=1 // pred_check_branch
      %277 = sbr.rel (0) target = $region21
    $region20: #{_lambda_.1} parent=1 // pred_region
      _
    $region21: #{_lambda_.1} parent=1 // pred_fallthru
      _
    %278 = vsyncpa [#allocation3], 1

</llo_original>
